<compile_context>
chip_gen: v7x
topology: tpu7x:2x2x1
jax: 0.10.0
libtpu: 0.0.40
codegen_flags: <defaults>
</compile_context>

<pallas_src>
import math
import functools
import numpy as np
import jax
import jax.numpy as jnp
from jax.experimental import pallas as pl
from jax.experimental.pallas import tpu as pltpu

# ----------------------------- config ---------------------------------------
NUM_IMAGES = 2
C_FEAT = 4
H_FEAT = W_FEAT = 16
IMG_H = IMG_W = 32
PROPS_PER_IMG = 8
POOL = 7                      # MultiScaleRoIAlign output_size
SAMPLING_RATIO = 2
REPR_SIZE = 32                # TwoMLPHead representation_size
NUM_CLASSES = 5               # FastRCNNPredictor num_classes (incl. background)
SCORE_THRESH = 0.05
NMS_THRESH = 0.5
DETECTIONS_PER_IMG = 10
BBOX_REG_WEIGHTS = (10.0, 10.0, 5.0, 5.0)     # default when bbox_reg_weights=None
BBOX_XFORM_CLIP = math.log(1000.0 / 16.0)

IN_FEATS = C_FEAT * POOL * POOL     # 196 flattened pooled features per roi
K_PAD = 256                          # padded contraction dim (multiple of 128)
HID_PAD = 128                        # padded hidden dim (multiple of 128)
OUT_W = 128                          # lane-dense output slab width
AUX_COL = 200                        # proposal geometry stashed in padded x cols
N_VALID_OUT = 5 * NUM_CLASSES        # [scores | x1 | y1 | x2 | y2]

VMEM_SPEC = pl.BlockSpec(memory_space=pltpu.MemorySpace.VMEM)


# -------------------- fused Pallas kernel (head + postproc math) -------------
def _fused_roi_head_kernel(x_ref, w6_ref, b6_ref, w7_ref, b7_ref,
                           wp_ref, bp_ref, out_ref):
    x = x_ref[...]                                             # (n_pad, 256)

    # TwoMLPHead: fc6 + ReLU, fc7 + ReLU   (MXU, f32 accumulation)
    h = jnp.dot(x, w6_ref[...], preferred_element_type=jnp.float32) + b6_ref[...]
    h = jnp.maximum(h, 0.0)
    h = jnp.dot(h, w7_ref[...], preferred_element_type=jnp.float32) + b7_ref[...]
    h = jnp.maximum(h, 0.0)

    # FastRCNNPredictor: single matmul, columns = [logits | dx | dy | dw | dh | 0pad]
    p = jnp.dot(h, wp_ref[...], preferred_element_type=jnp.float32) + bp_ref[...]

    nc = NUM_CLASSES
    logits = p[:, 0:nc]
    dx = p[:, 1 * nc:2 * nc] * (1.0 / BBOX_REG_WEIGHTS[0])
    dy = p[:, 2 * nc:3 * nc] * (1.0 / BBOX_REG_WEIGHTS[1])
    dw = jnp.minimum(p[:, 3 * nc:4 * nc] * (1.0 / BBOX_REG_WEIGHTS[2]), BBOX_XFORM_CLIP)
    dh = jnp.minimum(p[:, 4 * nc:5 * nc] * (1.0 / BBOX_REG_WEIGHTS[3]), BBOX_XFORM_CLIP)

    # per-roi proposal box + image (w, h) live in the zero-padded x columns
    aux = x[:, AUX_COL:AUX_COL + 6]
    px1 = aux[:, 0:1]
    py1 = aux[:, 1:2]
    px2 = aux[:, 2:3]
    py2 = aux[:, 3:4]
    imw = aux[:, 4:5]
    imh = aux[:, 5:6]

    # BoxCoder.decode with weights (10, 10, 5, 5)
    w = px2 - px1
    hgt = py2 - py1
    cx = px1 + 0.5 * w
    cy = py1 + 0.5 * hgt
    pcx = dx * w + cx
    pcy = dy * hgt + cy
    pw = jnp.exp(dw) * w
    ph = jnp.exp(dh) * hgt

    # clip_boxes_to_image
    x1 = jnp.minimum(jnp.maximum(pcx - 0.5 * pw, 0.0), imw)
    y1 = jnp.minimum(jnp.maximum(pcy - 0.5 * ph, 0.0), imh)
    x2 = jnp.minimum(jnp.maximum(pcx + 0.5 * pw, 0.0), imw)
    y2 = jnp.minimum(jnp.maximum(pcy + 0.5 * ph, 0.0), imh)

    # softmax over class logits (F.softmax(class_logits, -1)); divide on EUP
    m = jnp.max(logits, axis=-1, keepdims=True)
    e = jnp.exp(logits - m)
    scores = e * pl.reciprocal(jnp.sum(e, axis=-1, keepdims=True), approx=True)

    # single lane-dense 128-wide output slab (unmasked full-lane store)
    pad = jnp.zeros((x.shape[0], OUT_W - N_VALID_OUT), jnp.float32)
    out_ref[...] = jnp.concatenate([scores, x1, y1, x2, y2, pad], axis=-1)


# ------------------- RoI Align (plain JAX glue, gather-bound) ----------------
# TODO(synk): MultiScaleRoIAlign bilinear gather kept in plain JAX (runs inside
# the jit); at production sizes reformulate as a per-roi bilinear-weight-matrix
# x features MXU contraction or a scalar-prefetch Pallas DMA gather.
def roi_align_nchw(features, rois, batch_idx, spatial_scale,
                   out_size=POOL, sampling_ratio=SAMPLING_RATIO):
    B, C, H, W = features.shape
    N = rois.shape[0]
    s = spatial_scale
    x1 = rois[:, 0] * s
    y1 = rois[:, 1] * s
    x2 = rois[:, 2] * s
    y2 = rois[:, 3] * s
    roi_w = jnp.maximum(x2 - x1, 1.0)          # aligned=False semantics
    roi_h = jnp.maximum(y2 - y1, 1.0)
    bin_w = roi_w / out_size
    bin_h = roi_h / out_size
    g = sampling_ratio

    pidx = jnp.arange(out_size, dtype=jnp.float32)
    sidx = jnp.arange(g, dtype=jnp.float32)
    yc = (y1[:, None, None] + pidx[None, :, None] * bin_h[:, None, None]
          + (sidx[None, None, :] + 0.5) * bin_h[:, None, None] / g)      # [N,P,g]
    xc = (x1[:, None, None] + pidx[None, :, None] * bin_w[:, None, None]
          + (sidx[None, None, :] + 0.5) * bin_w[:, None, None] / g)      # [N,P,g]
    yy = jnp.broadcast_to(yc[:, :, None, :, None], (N, out_size, out_size, g, g))
    xx = jnp.broadcast_to(xc[:, None, :, None, :], (N, out_size, out_size, g, g))

    valid = ((yy >= -1.0) & (yy <= H) & (xx >= -1.0) & (xx <= W)).astype(jnp.float32)
    yyc = jnp.maximum(yy, 0.0)
    xxc = jnp.maximum(xx, 0.0)
    fy = jnp.floor(yyc)
    fx = jnp.floor(xxc)
    cond_y = fy >= (H - 1)
    cond_x = fx >= (W - 1)
    y_low = jnp.where(cond_y, H - 1, fy).astype(jnp.int32)
    y_high = jnp.where(cond_y, H - 1, fy + 1).astype(jnp.int32)
    ly = jnp.where(cond_y, 0.0, yyc - fy)
    x_low = jnp.where(cond_x, W - 1, fx).astype(jnp.int32)
    x_high = jnp.where(cond_x, W - 1, fx + 1).astype(jnp.int32)
    lx = jnp.where(cond_x, 0.0, xxc - fx)
    hy = 1.0 - ly
    hx = 1.0 - lx
    w1 = hy * hx * valid
    w2 = hy * lx * valid
    w3 = ly * hx * valid
    w4 = ly * lx * valid

    feat = features[batch_idx]                 # [N, C, H, W]

    def gather_one(f, yl, yh, xl, xh, a, b, c, d):
        v1 = f[:, yl, xl]
        v2 = f[:, yl, xh]
        v3 = f[:, yh, xl]
        v4 = f[:, yh, xh]
        val = a[None] * v1 + b[None] * v2 + c[None] * v3 + d[None] * v4
        return jnp.sum(val, axis=(-1, -2)) / float(g * g)   # [C, P, P]

    pooled = jax.vmap(gather_one)(feat, y_low, y_high, x_low, x_high, w1, w2, w3, w4)
    return pooled                               # [N, C, P, P]


# ----------------------- jitted device-side forward --------------------------
@functools.partial(jax.jit, static_argnames=("image_shapes",))
def _device_forward(features, proposals, params, *, image_shapes):
    B, C, Hf, Wf = features.shape
    # MultiScaleRoIAlign scale inference (single level): 2**round(log2(feat/img))
    spatial_scale = 2.0 ** round(math.log2(Hf / float(max(s[0] for s in image_shapes))))

    rois = jnp.concatenate(proposals, axis=0)                              # [N, 4]
    batch_idx = jnp.concatenate(
        [jnp.full((p.shape[0],), i, dtype=jnp.int32)
         for i, p in enumerate(proposals)])
    imwh = jnp.concatenate(
        [jnp.broadcast_to(jnp.array([[float(wh[1]), float(wh[0])]], jnp.float32),
                          (p.shape[0], 2))
         for wh, p in zip(image_shapes, proposals)], axis=0)               # [N, 2]

    pooled = roi_align_nchw(features, rois, batch_idx, spatial_scale)      # [N,C,7,7]
    n = pooled.shape[0]
    flat = pooled.reshape(n, IN_FEATS)                                     # torch.flatten(1)

    # build the padded activation slab with ONE concatenate + row-pad:
    # [flat | 0 | rois | imwh | 0]  (aux geometry lives in zero-weight columns)
    n_pad = ((n + 7) // 8) * 8
    zeros_a = jnp.zeros((n, AUX_COL - IN_FEATS), jnp.float32)
    zeros_b = jnp.zeros((n, K_PAD - AUX_COL - 6), jnp.float32)
    x = jnp.concatenate([flat, zeros_a, rois, imwh, zeros_b], axis=1)      # [n, 256]
    x = jnp.pad(x, ((0, n_pad - n), (0, 0)))                               # [n_pad, 256]

    slab = pl.pallas_call(
        _fused_roi_head_kernel,
        out_shape=jax.ShapeDtypeStruct((n_pad, OUT_W), jnp.float32),
        in_specs=[VMEM_SPEC] * 7,
        out_specs=VMEM_SPEC,
    )(x, params["w6"], params["b6"], params["w7"], params["b7"],
      params["wp"], params["bp"])

    return slab[:n, :N_VALID_OUT], flat


# -------------------------- numpy postprocess glue ---------------------------
# TODO(synk): score-threshold / remove_small_boxes / batched NMS / top-k produce
# dynamic shapes; done in numpy glue (exact torchvision semantics), not Pallas.
def _nms_np(boxes, scores, thr):
    if boxes.shape[0] == 0:
        return np.zeros((0,), dtype=np.int64)
    x1, y1, x2, y2 = boxes[:, 0], boxes[:, 1], boxes[:, 2], boxes[:, 3]
    areas = (x2 - x1) * (y2 - y1)
    order = np.argsort(-scores, kind="stable")
    suppressed = np.zeros(boxes.shape[0], dtype=bool)
    keep = []
    for pos, idx in enumerate(order):
        if suppressed[idx]:
            continue
        keep.append(idx)
        rest = order[pos + 1:]
        if rest.size == 0:
            continue
        xx1 = np.maximum(x1[idx], x1[rest])
        yy1 = np.maximum(y1[idx], y1[rest])
        xx2 = np.minimum(x2[idx], x2[rest])
        yy2 = np.minimum(y2[idx], y2[rest])
        inter = np.maximum(xx2 - xx1, 0.0) * np.maximum(yy2 - yy1, 0.0)
        iou = inter / (areas[idx] + areas[rest] - inter)
        suppressed[rest[iou > thr]] = True
    return np.asarray(keep, dtype=np.int64)


def _batched_nms_np(boxes, scores, labels, thr):
    if boxes.shape[0] == 0:
        return np.zeros((0,), dtype=np.int64)
    max_coord = boxes.max()
    offsets = labels.astype(boxes.dtype) * (max_coord + 1.0)
    return _nms_np(boxes + offsets[:, None], scores, thr)


def postprocess_detections_np(boxes_all, scores_all, boxes_per_image):
    all_boxes, all_scores, all_labels = [], [], []
    start = 0
    for n in boxes_per_image:
        boxes = boxes_all[start:start + n]        # [n, C, 4] (already clipped)
        scores = scores_all[start:start + n]      # [n, C]
        start += n
        labels = np.broadcast_to(np.arange(NUM_CLASSES, dtype=np.int64),
                                 scores.shape).copy()
        boxes = boxes[:, 1:].reshape(-1, 4)
        scores = scores[:, 1:].reshape(-1)
        labels = labels[:, 1:].reshape(-1)
        inds = np.where(scores > SCORE_THRESH)[0]
        boxes, scores, labels = boxes[inds], scores[inds], labels[inds]
        ws = boxes[:, 2] - boxes[:, 0]
        hs = boxes[:, 3] - boxes[:, 1]
        keep = np.where((ws >= 0.01) & (hs >= 0.01))[0]
        boxes, scores, labels = boxes[keep], scores[keep], labels[keep]
        keep = _batched_nms_np(boxes, scores, labels, NMS_THRESH)
        keep = keep[:DETECTIONS_PER_IMG]
        all_boxes.append(boxes[keep])
        all_scores.append(scores[keep])
        all_labels.append(labels[keep])
    return all_boxes, all_scores, all_labels


# ----------------------------- full forward ----------------------------------
def roi_heads_forward(features, proposals, image_shapes, params_padded, targets=None):
    assert targets is None  # inference path only (training sampling not implemented)
    slab, _ = _device_forward(features, tuple(proposals), params_padded,
                              image_shapes=tuple(map(tuple, image_shapes)))
    slab = np.asarray(jax.block_until_ready(slab))        # single host transfer

    nc = NUM_CLASSES
    scores = slab[:, 0:nc]
    boxes = np.stack([slab[:, 1 * nc:2 * nc], slab[:, 2 * nc:3 * nc],
                      slab[:, 3 * nc:4 * nc], slab[:, 4 * nc:5 * nc]], axis=-1)

    boxes_per_image = [int(p.shape[0]) for p in proposals]
    b, s, l = postprocess_detections_np(boxes, scores, boxes_per_image)
    result = [{"boxes": b[i], "labels": l[i], "scores": s[i]}
              for i in range(len(boxes_per_image))]
    return result, None, None, None, None


# ------------------------- host-side param preparation -----------------------
def pad_to(a, rows, cols):
    return jnp.pad(a, ((0, rows - a.shape[0]), (0, cols - a.shape[1])))


def build_padded_params(raw):
    # coordinate-major permutation of the bbox head: old col (c*4 + k) -> new
    # col (k*NUM_CLASSES + c)  =>  output layout [dx(all cls)|dy|dw|dh]
    perm = np.array([c * 4 + k for k in range(4) for c in range(NUM_CLASSES)],
                    dtype=np.int32)
    wp = jnp.concatenate([raw["wc"], raw["wb"][:, perm]], axis=1)   # (32, 25)
    bp = jnp.concatenate([raw["bc"], raw["bb"][:, perm]], axis=1)   # (1, 25)
    return {
        "w6": pad_to(raw["w6"], K_PAD, HID_PAD),
        "b6": pad_to(raw["b6"], 1, HID_PAD),
        "w7": pad_to(raw["w7"], HID_PAD, HID_PAD),
        "b7": pad_to(raw["b7"], 1, HID_PAD),
        "wp": pad_to(wp, HID_PAD, OUT_W),
        "bp": pad_to(bp, 1, OUT_W),
    }


# ---------------------- plain numpy reference (sanity) ------------------------
def reference_slab(flat, rois, imwh, raw):
    h = np.maximum(flat @ raw["w6"] + raw["b6"], 0.0)
    h = np.maximum(h @ raw["w7"] + raw["b7"], 0.0)
    logits = h @ raw["wc"] + raw["bc"]
    breg = h @ raw["wb"] + raw["bb"]
    e = np.exp(logits - logits.max(-1, keepdims=True))
    scores = e / e.sum(-1, keepdims=True)
    rel = breg.reshape(-1, NUM_CLASSES, 4)
    dx = rel[..., 0] / BBOX_REG_WEIGHTS[0]
    dy = rel[..., 1] / BBOX_REG_WEIGHTS[1]
    dw = np.minimum(rel[..., 2] / BBOX_REG_WEIGHTS[2], BBOX_XFORM_CLIP)
    dh = np.minimum(rel[..., 3] / BBOX_REG_WEIGHTS[3], BBOX_XFORM_CLIP)
    px1, py1 = rois[:, 0:1], rois[:, 1:2]
    px2, py2 = rois[:, 2:3], rois[:, 3:4]
    w = px2 - px1
    hh = py2 - py1
    cx = px1 + 0.5 * w
    cy = py1 + 0.5 * hh
    pcx = dx * w + cx
    pcy = dy * hh + cy
    pw = np.exp(dw) * w
    ph = np.exp(dh) * hh
    imw, imh = imwh[:, 0:1], imwh[:, 1:2]
    x1 = np.clip(pcx - 0.5 * pw, 0.0, imw)
    y1 = np.clip(pcy - 0.5 * ph, 0.0, imh)
    x2 = np.clip(pcx + 0.5 * pw, 0.0, imw)
    y2 = np.clip(pcy + 0.5 * ph, 0.0, imh)
    return np.concatenate([scores, x1, y1, x2, y2], axis=1).astype(np.float32)


# ---------------------------------- main --------------------------------------
if __name__ == "__main__":
    key = jax.random.PRNGKey(0)
    (k_feat, k_prop, k_w6, k_b6, k_w7, k_b7,
     k_wc, k_bc, k_wb, k_bb) = jax.random.split(key, 10)

    features = jax.random.normal(k_feat, (NUM_IMAGES, C_FEAT, H_FEAT, W_FEAT),
                                 dtype=jnp.float32)

    kx, ky, kw, kh = jax.random.split(k_prop, 4)
    x1 = jax.random.uniform(kx, (NUM_IMAGES, PROPS_PER_IMG), minval=0.0, maxval=22.0)
    y1 = jax.random.uniform(ky, (NUM_IMAGES, PROPS_PER_IMG), minval=0.0, maxval=22.0)
    bw = jax.random.uniform(kw, (NUM_IMAGES, PROPS_PER_IMG), minval=4.0, maxval=10.0)
    bh = jax.random.uniform(kh, (NUM_IMAGES, PROPS_PER_IMG), minval=4.0, maxval=10.0)
    x2 = jnp.minimum(x1 + bw, float(IMG_W))
    y2 = jnp.minimum(y1 + bh, float(IMG_H))
    proposals = tuple(jnp.stack([x1[i], y1[i], x2[i], y2[i]], axis=1).astype(jnp.float32)
                      for i in range(NUM_IMAGES))
    image_shapes = tuple((IMG_H, IMG_W) for _ in range(NUM_IMAGES))

    raw_params = {
        "w6": 0.05 * jax.random.normal(k_w6, (IN_FEATS, REPR_SIZE), jnp.float32),
        "b6": 0.01 * jax.random.normal(k_b6, (1, REPR_SIZE), jnp.float32),
        "w7": 0.05 * jax.random.normal(k_w7, (REPR_SIZE, REPR_SIZE), jnp.float32),
        "b7": 0.01 * jax.random.normal(k_b7, (1, REPR_SIZE), jnp.float32),
        "wc": 0.05 * jax.random.normal(k_wc, (REPR_SIZE, NUM_CLASSES), jnp.float32),
        "bc": 0.01 * jax.random.normal(k_bc, (1, NUM_CLASSES), jnp.float32),
        "wb": 0.05 * jax.random.normal(k_wb, (REPR_SIZE, NUM_CLASSES * 4), jnp.float32),
        "bb": 0.01 * jax.random.normal(k_bb, (1, NUM_CLASSES * 4), jnp.float32),
    }
    params_padded = build_padded_params(raw_params)

    # ---- run once, verify fused kernel against a plain numpy reference -------
    slab_dev, flat_dev = _device_forward(features, proposals, params_padded,
                                         image_shapes=image_shapes)
    jax.block_until_ready(slab_dev)
    slab_np = np.asarray(slab_dev)
    flat_np = np.asarray(flat_dev)

    rois_np = np.concatenate([np.asarray(p) for p in proposals], axis=0)
    imwh_np = np.concatenate(
        [np.broadcast_to(np.array([[float(IMG_W), float(IMG_H)]], np.float32),
                         (PROPS_PER_IMG, 2)) for _ in range(NUM_IMAGES)], axis=0)
    raw_np = {k: np.asarray(v) for k, v in raw_params.items()}
    ref = reference_slab(flat_np, rois_np, imwh_np, raw_np)
    np.testing.assert_allclose(slab_np, ref, rtol=5e-2, atol=5e-2)

    # ---- full forward (reuses the compiled jit; single host sync) ------------
    result, scl, sbr, slab_, sregt = roi_heads_forward(
        features, proposals, image_shapes, params_padded, targets=None)

    # basic sanity on output structure
    assert len(result) == NUM_IMAGES
    for r in result:
        assert r["boxes"].shape[1] == 4
        assert r["boxes"].shape[0] == r["scores"].shape[0] == r["labels"].shape[0]
        assert r["boxes"].shape[0] <= DETECTIONS_PER_IMG
    print("KERNEL_OK")
</pallas_src>

<mosaic_0001>
module attributes {stable_mosaic.version = 11 : i64} {
  func.func private @main(%arg0: i32) attributes {dimension_semantics = [#tpu.dimension_semantics<core_parallel>], iteration_bounds = array<i64: 2>, tpu.core_type = #tpu.core_type<sc_scalar_subcore>, window_params = []} {
    return
  }
}

module attributes {stable_mosaic.version = 11 : i64} {
  func.func private @main(%arg0: i32) attributes {dimension_semantics = [#tpu.dimension_semantics<core_parallel>], iteration_bounds = array<i64: 2>, tpu.core_type = #tpu.core_type<sc_scalar_subcore>, window_params = []} {
    return
  }
}

module attributes {stable_mosaic.version = 11 : i64} {
  func.func @_fused_roi_head_kernel(%arg0: memref<16x256xf32, #tpu.memory_space<vmem>>, %arg1: memref<256x128xf32, #tpu.memory_space<vmem>>, %arg2: memref<1x128xf32, #tpu.memory_space<vmem>>, %arg3: memref<128x128xf32, #tpu.memory_space<vmem>>, %arg4: memref<1x128xf32, #tpu.memory_space<vmem>>, %arg5: memref<128x128xf32, #tpu.memory_space<vmem>>, %arg6: memref<1x128xf32, #tpu.memory_space<vmem>>, %arg7: memref<16x128xf32, #tpu.memory_space<vmem>>) attributes {dimension_semantics = [], scalar_prefetch = 0 : i64, scratch_operands = 0 : i64, tpu.core_type = #tpu.core_type<tc>} {
    %c0 = arith.constant 0 : index
    %c0_0 = arith.constant 0 : index
    %0 = vector.load %arg0[%c0, %c0_0] : memref<16x256xf32, #tpu.memory_space<vmem>>, vector<16x256xf32>
    %c0_1 = arith.constant 0 : index
    %c0_2 = arith.constant 0 : index
    %1 = vector.load %arg1[%c0_1, %c0_2] : memref<256x128xf32, #tpu.memory_space<vmem>>, vector<256x128xf32>
    %cst = arith.constant dense<0.000000e+00> : vector<16x128xf32>
    %2 = tpu.matmul %0, %1, %cst {dimension_numbers = #tpu.dot_dimension_numbers<[1], [0], [0], [1], [0, 0, 1, 1], [], []>} : vector<16x256xf32>, vector<256x128xf32>, vector<16x128xf32> -> vector<16x128xf32>
    %c0_3 = arith.constant 0 : index
    %c0_4 = arith.constant 0 : index
    %3 = vector.load %arg2[%c0_3, %c0_4] : memref<1x128xf32, #tpu.memory_space<vmem>>, vector<1x128xf32>
    %4 = vector.broadcast %3 : vector<1x128xf32> to vector<16x128xf32>
    %5 = arith.addf %2, %4 : vector<16x128xf32>
    %cst_5 = arith.constant 0.000000e+00 : f32
    %6 = vector.broadcast %cst_5 : f32 to vector<16x128xf32>
    %7 = arith.maximumf %5, %6 : vector<16x128xf32>
    %c0_6 = arith.constant 0 : index
    %c0_7 = arith.constant 0 : index
    %8 = vector.load %arg3[%c0_6, %c0_7] : memref<128x128xf32, #tpu.memory_space<vmem>>, vector<128x128xf32>
    %cst_8 = arith.constant dense<0.000000e+00> : vector<16x128xf32>
    %9 = tpu.matmul %7, %8, %cst_8 {dimension_numbers = #tpu.dot_dimension_numbers<[1], [0], [0], [1], [0, 0, 1, 1], [], []>} : vector<16x128xf32>, vector<128x128xf32>, vector<16x128xf32> -> vector<16x128xf32>
    %c0_9 = arith.constant 0 : index
    %c0_10 = arith.constant 0 : index
    %10 = vector.load %arg4[%c0_9, %c0_10] : memref<1x128xf32, #tpu.memory_space<vmem>>, vector<1x128xf32>
    %11 = vector.broadcast %10 : vector<1x128xf32> to vector<16x128xf32>
    %12 = arith.addf %9, %11 : vector<16x128xf32>
    %cst_11 = arith.constant 0.000000e+00 : f32
    %13 = vector.broadcast %cst_11 : f32 to vector<16x128xf32>
    %14 = arith.maximumf %12, %13 : vector<16x128xf32>
    %c0_12 = arith.constant 0 : index
    %c0_13 = arith.constant 0 : index
    %15 = vector.load %arg5[%c0_12, %c0_13] : memref<128x128xf32, #tpu.memory_space<vmem>>, vector<128x128xf32>
    %cst_14 = arith.constant dense<0.000000e+00> : vector<16x128xf32>
    %16 = tpu.matmul %14, %15, %cst_14 {dimension_numbers = #tpu.dot_dimension_numbers<[1], [0], [0], [1], [0, 0, 1, 1], [], []>} : vector<16x128xf32>, vector<128x128xf32>, vector<16x128xf32> -> vector<16x128xf32>
    %c0_15 = arith.constant 0 : index
    %c0_16 = arith.constant 0 : index
    %17 = vector.load %arg6[%c0_15, %c0_16] : memref<1x128xf32, #tpu.memory_space<vmem>>, vector<1x128xf32>
    %18 = vector.broadcast %17 : vector<1x128xf32> to vector<16x128xf32>
    %19 = arith.addf %16, %18 : vector<16x128xf32>
    %20 = vector.extract_strided_slice %19 {offsets = [0, 0], sizes = [16, 5], strides = [1, 1]} : vector<16x128xf32> to vector<16x5xf32>
    %21 = vector.extract_strided_slice %19 {offsets = [0, 5], sizes = [16, 5], strides = [1, 1]} : vector<16x128xf32> to vector<16x5xf32>
    %cst_17 = arith.constant 1.000000e-01 : f32
    %22 = vector.broadcast %cst_17 : f32 to vector<16x5xf32>
    %23 = arith.mulf %21, %22 : vector<16x5xf32>
    %24 = vector.extract_strided_slice %19 {offsets = [0, 10], sizes = [16, 5], strides = [1, 1]} : vector<16x128xf32> to vector<16x5xf32>
    %cst_18 = arith.constant 1.000000e-01 : f32
    %25 = vector.broadcast %cst_18 : f32 to vector<16x5xf32>
    %26 = arith.mulf %24, %25 : vector<16x5xf32>
    %27 = vector.extract_strided_slice %19 {offsets = [0, 15], sizes = [16, 5], strides = [1, 1]} : vector<16x128xf32> to vector<16x5xf32>
    %cst_19 = arith.constant 2.000000e-01 : f32
    %28 = vector.broadcast %cst_19 : f32 to vector<16x5xf32>
    %29 = arith.mulf %27, %28 : vector<16x5xf32>
    %cst_20 = arith.constant 4.13516665 : f32
    %30 = vector.broadcast %cst_20 : f32 to vector<16x5xf32>
    %31 = arith.minimumf %29, %30 : vector<16x5xf32>
    %32 = vector.extract_strided_slice %19 {offsets = [0, 20], sizes = [16, 5], strides = [1, 1]} : vector<16x128xf32> to vector<16x5xf32>
    %cst_21 = arith.constant 2.000000e-01 : f32
    %33 = vector.broadcast %cst_21 : f32 to vector<16x5xf32>
    %34 = arith.mulf %32, %33 : vector<16x5xf32>
    %cst_22 = arith.constant 4.13516665 : f32
    %35 = vector.broadcast %cst_22 : f32 to vector<16x5xf32>
    %36 = arith.minimumf %34, %35 : vector<16x5xf32>
    %37 = vector.extract_strided_slice %0 {offsets = [0, 200], sizes = [16, 6], strides = [1, 1]} : vector<16x256xf32> to vector<16x6xf32>
    %38 = vector.extract_strided_slice %37 {offsets = [0, 0], sizes = [16, 1], strides = [1, 1]} : vector<16x6xf32> to vector<16x1xf32>
    %39 = vector.extract_strided_slice %37 {offsets = [0, 1], sizes = [16, 1], strides = [1, 1]} : vector<16x6xf32> to vector<16x1xf32>
    %40 = vector.extract_strided_slice %37 {offsets = [0, 2], sizes = [16, 1], strides = [1, 1]} : vector<16x6xf32> to vector<16x1xf32>
    %41 = vector.extract_strided_slice %37 {offsets = [0, 3], sizes = [16, 1], strides = [1, 1]} : vector<16x6xf32> to vector<16x1xf32>
    %42 = vector.extract_strided_slice %37 {offsets = [0, 4], sizes = [16, 1], strides = [1, 1]} : vector<16x6xf32> to vector<16x1xf32>
    %43 = vector.extract_strided_slice %37 {offsets = [0, 5], sizes = [16, 1], strides = [1, 1]} : vector<16x6xf32> to vector<16x1xf32>
    %44 = arith.subf %40, %38 : vector<16x1xf32>
    %45 = arith.subf %41, %39 : vector<16x1xf32>
    %cst_23 = arith.constant 5.000000e-01 : f32
    %46 = vector.broadcast %cst_23 : f32 to vector<16x1xf32>
    %47 = arith.mulf %46, %44 : vector<16x1xf32>
    %48 = arith.addf %38, %47 : vector<16x1xf32>
    %cst_24 = arith.constant 5.000000e-01 : f32
    %49 = vector.broadcast %cst_24 : f32 to vector<16x1xf32>
    %50 = arith.mulf %49, %45 : vector<16x1xf32>
    %51 = arith.addf %39, %50 : vector<16x1xf32>
    %52 = vector.broadcast %44 : vector<16x1xf32> to vector<16x5xf32>
    %53 = arith.mulf %23, %52 : vector<16x5xf32>
    %54 = vector.broadcast %48 : vector<16x1xf32> to vector<16x5xf32>
    %55 = arith.addf %53, %54 : vector<16x5xf32>
    %56 = vector.broadcast %45 : vector<16x1xf32> to vector<16x5xf32>
    %57 = arith.mulf %26, %56 : vector<16x5xf32>
    %58 = vector.broadcast %51 : vector<16x1xf32> to vector<16x5xf32>
    %59 = arith.addf %57, %58 : vector<16x5xf32>
    %60 = math.exp %31 : vector<16x5xf32>
    %61 = vector.broadcast %44 : vector<16x1xf32> to vector<16x5xf32>
    %62 = arith.mulf %60, %61 : vector<16x5xf32>
    %63 = math.exp %36 : vector<16x5xf32>
    %64 = vector.broadcast %45 : vector<16x1xf32> to vector<16x5xf32>
    %65 = arith.mulf %63, %64 : vector<16x5xf32>
    %cst_25 = arith.constant 5.000000e-01 : f32
    %66 = vector.broadcast %cst_25 : f32 to vector<16x5xf32>
    %67 = arith.mulf %66, %62 : vector<16x5xf32>
    %68 = arith.subf %55, %67 : vector<16x5xf32>
    %cst_26 = arith.constant 0.000000e+00 : f32
    %69 = vector.broadcast %cst_26 : f32 to vector<16x5xf32>
    %70 = arith.maximumf %68, %69 : vector<16x5xf32>
    %71 = vector.broadcast %42 : vector<16x1xf32> to vector<16x5xf32>
    %72 = arith.minimumf %70, %71 : vector<16x5xf32>
    %cst_27 = arith.constant 5.000000e-01 : f32
    %73 = vector.broadcast %cst_27 : f32 to vector<16x5xf32>
    %74 = arith.mulf %73, %65 : vector<16x5xf32>
    %75 = arith.subf %59, %74 : vector<16x5xf32>
    %cst_28 = arith.constant 0.000000e+00 : f32
    %76 = vector.broadcast %cst_28 : f32 to vector<16x5xf32>
    %77 = arith.maximumf %75, %76 : vector<16x5xf32>
    %78 = vector.broadcast %43 : vector<16x1xf32> to vector<16x5xf32>
    %79 = arith.minimumf %77, %78 : vector<16x5xf32>
    %cst_29 = arith.constant 5.000000e-01 : f32
    %80 = vector.broadcast %cst_29 : f32 to vector<16x5xf32>
    %81 = arith.mulf %80, %62 : vector<16x5xf32>
    %82 = arith.addf %55, %81 : vector<16x5xf32>
    %cst_30 = arith.constant 0.000000e+00 : f32
    %83 = vector.broadcast %cst_30 : f32 to vector<16x5xf32>
    %84 = arith.maximumf %82, %83 : vector<16x5xf32>
    %85 = vector.broadcast %42 : vector<16x1xf32> to vector<16x5xf32>
    %86 = arith.minimumf %84, %85 : vector<16x5xf32>
    %cst_31 = arith.constant 5.000000e-01 : f32
    %87 = vector.broadcast %cst_31 : f32 to vector<16x5xf32>
    %88 = arith.mulf %87, %65 : vector<16x5xf32>
    %89 = arith.addf %59, %88 : vector<16x5xf32>
    %cst_32 = arith.constant 0.000000e+00 : f32
    %90 = vector.broadcast %cst_32 : f32 to vector<16x5xf32>
    %91 = arith.maximumf %89, %90 : vector<16x5xf32>
    %92 = vector.broadcast %43 : vector<16x1xf32> to vector<16x5xf32>
    %93 = arith.minimumf %91, %92 : vector<16x5xf32>
    %cst_33 = arith.constant dense<0xFF800000> : vector<16xf32>
    %94 = vector.multi_reduction <maximumf>, %20, %cst_33 [1] : vector<16x5xf32> to vector<16xf32>
    %95 = vector.shape_cast %94 : vector<16xf32> to vector<16x1xf32>
    %96 = vector.broadcast %95 : vector<16x1xf32> to vector<16x5xf32>
    %97 = arith.subf %20, %96 : vector<16x5xf32>
    %98 = math.exp %97 : vector<16x5xf32>
    %cst_34 = arith.constant dense<0.000000e+00> : vector<16xf32>
    %99 = vector.multi_reduction <add>, %98, %cst_34 [1] : vector<16x5xf32> to vector<16xf32>
    %100 = vector.shape_cast %99 : vector<16xf32> to vector<16x1xf32>
    %101 = tpu.reciprocal %100 {approx = true} : vector<16x1xf32> -> vector<16x1xf32>
    %102 = vector.broadcast %101 : vector<16x1xf32> to vector<16x5xf32>
    %103 = arith.mulf %98, %102 : vector<16x5xf32>
    %cst_35 = arith.constant 0.000000e+00 : f32
    %104 = vector.broadcast %cst_35 : f32 to vector<16x103xf32>
    %105 = tpu.concatenate %103, %72, %79, %86, %93, %104 in 1 : vector<16x5xf32>, vector<16x5xf32>, vector<16x5xf32>, vector<16x5xf32>, vector<16x5xf32>, vector<16x103xf32> -> vector<16x128xf32>
    %c0_36 = arith.constant 0 : index
    %c0_37 = arith.constant 0 : index
    %106 = vector.load %arg7[%c0_36, %c0_37] : memref<16x128xf32, #tpu.memory_space<vmem>>, vector<16x128xf32>
    tpu.vector_store %arg7[%c0_36, %c0_37], %105 {strides = array<i32>} : memref<16x128xf32, #tpu.memory_space<vmem>>, vector<16x128xf32>,
    return
  }
}

</mosaic_0001>

<llo_original>
// kernel: _device_forward.1
$region0: #{_device_forward.1}
  #allocation0 [shape = 'u32[]', space=smem, size = 0x4, offset = 0x4, fixed_abs, tag = 'smem constant byte address 0x4 - core index']
  #allocation1 [shape = 'u32[144,128]{1,0:T(1,128)}', space=vmem, size = 0x12000, scoped, tag = 'internal scratch']
  %s0 = inlined_call_operand.vmem [shape: f32[16,256], index: 0, kind: input, shape index: {}]
  %s1 = inlined_call_operand.vmem [shape: f32[256,128], index: 1, kind: input, shape index: {}]
  %s2 = inlined_call_operand.vmem [shape: f32[1,128], index: 2, kind: input, shape index: {}]
  %s3 = inlined_call_operand.vmem [shape: f32[128,128], index: 3, kind: input, shape index: {}]
  %s4 = inlined_call_operand.vmem [shape: f32[1,128], index: 4, kind: input, shape index: {}]
  %s5 = inlined_call_operand.vmem [shape: f32[128,128], index: 5, kind: input, shape index: {}]
  %s6 = inlined_call_operand.vmem [shape: f32[1,128], index: 6, kind: input, shape index: {}]
  %s7 = inlined_call_operand.hbm [shape: f32[16,128], index: 7, kind: output, shape index: {}]
  %s8 = sld [smem:[#allocation0]]
  $region38: #{_device_forward.1} parent=0
    _
  %s10 = ssub.s32 1, %s8
  %s11 = scalar_select 0, %s10, %s8
  $region1: #{_device_forward.1} parent=0
    #allocation2 [shape = 'u8[8192]{0}', space=vmem, size = 0x2000, scoped, tag = 'output window, operand 0, single buffered']
    #allocation3 [shape = 's32[1]{0}', space=sflag, size = 0x4, scoped, tag = 'scoped memory for _device_forward.1']
    %12 = vsyncpa [#allocation3], 0
    // Predicated region
    $region2: #{_device_forward.1} parent=1 // pred_check
      _
    $region3: #{_device_forward.1} parent=1 // pred_check_branch
      %14 = sbr.rel (0) target = $region5
    $region4: #{_device_forward.1} parent=1 // pred_region
      _
    $region5: #{_device_forward.1} parent=1 // pred_fallthru
      _
    // Predicated region
    $region6: #{_device_forward.1} parent=1 // pred_check
      _
    $region7: #{_device_forward.1} parent=1 // pred_check_branch
      %16 = sbr.rel (0) target = $region9
    $region8: #{_device_forward.1} parent=1 // pred_region
      _
    $region9: #{_device_forward.1} parent=1 // pred_fallthru
      _
    // Predicated region
    $region10: #{_device_forward.1} parent=1 // pred_check
      _
    $region11: #{_device_forward.1} parent=1 // pred_check_branch
      %18 = sbr.rel (0) target = $region13
    $region12: #{_device_forward.1} parent=1 // pred_region
      _
    $region13: #{_device_forward.1} parent=1 // pred_fallthru
      _
    // Predicated region
    $region14: #{_device_forward.1} parent=1 // pred_check
      _
    $region15: #{_device_forward.1} parent=1 // pred_check_branch
      %20 = sbr.rel (0) target = $region17
    $region16: #{_device_forward.1} parent=1 // pred_region
      _
    $region17: #{_device_forward.1} parent=1 // pred_fallthru
      _
    // Predicated region
    $region18: #{_device_forward.1} parent=1 // pred_check
      _
    $region19: #{_device_forward.1} parent=1 // pred_check_branch
      %22 = sbr.rel (0) target = $region21
    $region20: #{_device_forward.1} parent=1 // pred_region
      _
    $region21: #{_device_forward.1} parent=1 // pred_fallthru
      _
    // Predicated region
    $region22: #{_device_forward.1} parent=1 // pred_check
      _
    $region23: #{_device_forward.1} parent=1 // pred_check_branch
      %24 = sbr.rel (0) target = $region25
    $region24: #{_device_forward.1} parent=1 // pred_region
      _
    $region25: #{_device_forward.1} parent=1 // pred_fallthru
      _
    // Predicated region
    $region26: #{_device_forward.1} parent=1 // pred_check
      _
    $region27: #{_device_forward.1} parent=1 // pred_check_branch
      %26 = sbr.rel (0) target = $region29
    $region28: #{_device_forward.1} parent=1 // pred_region
      _
    $region29: #{_device_forward.1} parent=1 // pred_fallthru
      _
    %v27 = vld [vmem:[%s0] sm:$0xff]
    %v28 = vld [vmem:[%s0 + $0x8] sm:$0xff]
    %v29 = vld [vmem:[%s0 + $0x10] sm:$0xff]
    %v30 = vld [vmem:[%s0 + $0x18] sm:$0xff]
    %v31 = vld [vmem:[%s1] sm:$0xff]
    %v32 = vld [vmem:[%s1 + $0x8] sm:$0xff]
    %v33 = vld [vmem:[%s1 + $0x10] sm:$0xff]
    %v34 = vld [vmem:[%s1 + $0x18] sm:$0xff]
    %v35 = vld [vmem:[%s1 + $0x20] sm:$0xff]
    %v36 = vld [vmem:[%s1 + $0x28] sm:$0xff]
    %v37 = vld [vmem:[%s1 + $0x30] sm:$0xff]
    %v38 = vld [vmem:[%s1 + $0x38] sm:$0xff]
    %v39 = vld [vmem:[%s1 + $0x40] sm:$0xff]
    %v40 = vld [vmem:[%s1 + $0x48] sm:$0xff]
    %v41 = vld [vmem:[%s1 + $0x50] sm:$0xff]
    %v42 = vld [vmem:[%s1 + $0x58] sm:$0xff]
    %v43 = vld [vmem:[%s1 + $0x60] sm:$0xff]
    %v44 = vld [vmem:[%s1 + $0x68] sm:$0xff]
    %v45 = vld [vmem:[%s1 + $0x70] sm:$0xff]
    %v46 = vld [vmem:[%s1 + $0x78] sm:$0xff]
    %v47 = vld [vmem:[%s1 + $0x80] sm:$0xff]
    %v48 = vld [vmem:[%s1 + $0x88] sm:$0xff]
    %v49 = vld [vmem:[%s1 + $0x90] sm:$0xff]
    %v50 = vld [vmem:[%s1 + $0x98] sm:$0xff]
    %v51 = vld [vmem:[%s1 + $0xa0] sm:$0xff]
    %v52 = vld [vmem:[%s1 + $0xa8] sm:$0xff]
    %v53 = vld [vmem:[%s1 + $0xb0] sm:$0xff]
    %v54 = vld [vmem:[%s1 + $0xb8] sm:$0xff]
    %v55 = vld [vmem:[%s1 + $0xc0] sm:$0xff]
    %v56 = vld [vmem:[%s1 + $0xc8] sm:$0xff]
    %v57 = vld [vmem:[%s1 + $0xd0] sm:$0xff]
    %v58 = vld [vmem:[%s1 + $0xd8] sm:$0xff]
    %v59 = vld [vmem:[%s1 + $0xe0] sm:$0xff]
    %v60 = vld [vmem:[%s1 + $0xe8] sm:$0xff]
    %v61 = vld [vmem:[%s1 + $0xf0] sm:$0xff]
    %v62 = vld [vmem:[%s1 + $0xf8] sm:$0xff]
    %v63 = vld [vmem:[%s2] sm:$0x1]
    %v65 = vlaneseq
    %v66 = vshrl.u32 %v65, 7
    %v67 = vsub.s32 0, %v66
    %v68 = vrot.slane %v63, %v67
    %70 = vmatprep.subr.mxu0 0.0
    %71 = vmatpush1.msra.mxu0 %v31
    %72 = vmatprep.subr.mxu0 0.0
    %73 = vmatpush1.msra.mxu0 %v32
    %74 = vmatprep.subr.mxu0 0.0
    %75 = vmatpush1.msra.mxu0 %v33
    %76 = vmatprep.subr.mxu0 0.0
    %77 = vmatpush1.msra.mxu0 %v34
    %78 = vmatprep.subr.mxu0 0.0
    %79 = vmatpush1.msra.mxu0 %v35
    %80 = vmatprep.subr.mxu0 0.0
    %81 = vmatpush1.msra.mxu0 %v36
    %82 = vmatprep.subr.mxu0 0.0
    %83 = vmatpush1.msra.mxu0 %v37
    %84 = vmatprep.subr.mxu0 0.0
    %85 = vmatpush1.msra.mxu0 %v38
    %86 = vmatprep.subr.mxu0 0.0
    %87 = vmatpush1.msra.mxu0 %v39
    %88 = vmatprep.subr.mxu0 0.0
    %89 = vmatpush1.msra.mxu0 %v40
    %90 = vmatprep.subr.mxu0 0.0
    %91 = vmatpush1.msra.mxu0 %v41
    %92 = vmatprep.subr.mxu0 0.0
    %93 = vmatpush1.msra.mxu0 %v42
    %94 = vmatprep.subr.mxu0 0.0
    %95 = vmatpush1.msra.mxu0 %v43
    %96 = vmatprep.subr.mxu0 0.0
    %97 = vmatpush1.msra.mxu0 %v44
    %98 = vmatprep.subr.mxu0 0.0
    %99 = vmatpush1.msra.mxu0 %v45
    %100 = vmatprep.subr.mxu0 0.0
    %101 = vmatpush1.msra.mxu0 %v46
    %102 = vmatprep.subr.mxu0 0.0
    %103 = vmatpush1.msra.mxu0 %v47
    %104 = vmatprep.subr.mxu0 0.0
    %105 = vmatpush1.msra.mxu0 %v48
    %106 = vmatprep.subr.mxu0 0.0
    %107 = vmatpush1.msra.mxu0 %v49
    %108 = vmatprep.subr.mxu0 0.0
    %109 = vmatpush1.msra.mxu0 %v50
    %110 = vmatprep.subr.mxu0 0.0
    %111 = vmatpush1.msra.mxu0 %v51
    %112 = vmatprep.subr.mxu0 0.0
    %113 = vmatpush1.msra.mxu0 %v52
    %114 = vmatprep.subr.mxu0 0.0
    %115 = vmatpush1.msra.mxu0 %v53
    %116 = vmatprep.subr.mxu0 0.0
    %117 = vmatpush1.msra.mxu0 %v54
    %118 = vmatprep.subr.mxu0 0.0
    %119 = vmatpush1.msra.mxu0 %v55
    %120 = vmatprep.subr.mxu0 0.0
    %121 = vmatpush1.msra.mxu0 %v56
    %122 = vmatprep.subr.mxu0 0.0
    %123 = vmatpush1.msra.mxu0 %v57
    %124 = vmatprep.subr.mxu0 0.0
    %125 = vmatpush1.msra.mxu0 %v58
    %126 = vmatprep.subr.mxu0 0.0
    %127 = vmatpush1.msra.mxu0 %v59
    %128 = vmatprep.subr.mxu0 0.0
    %129 = vmatpush1.msra.mxu0 %v60
    %130 = vmatprep.subr.mxu0 0.0
    %131 = vmatpush1.msra.mxu0 %v61
    %132 = vmatprep.subr.mxu0 0.0
    %133 = vmatpush1.msra.mxu0 %v62
    %134 = vmatprep.mubr.f32.mxu0 %v28
    %135 = vmatmul.mubr.f32.gmra.mrb[0].mxu0 %v27
    %v136 = vpop.f32.mrb[0].mxu0
    %v137 = vadd.f32 %v68, %v136
    %v138 = vpop.f32.mrb[0].mxu0
    %139 = vmatprep.mubr.f32.mxu0 %v30
    %140 = vmatmul.mubr.f32.gmra.mrb[0].mxu0 %v29
    %v141 = vpop.f32.mrb[0].mxu0
    %v142 = vadd.f32 %v68, %v141
    %v143 = vpop.f32.mrb[0].mxu0
    %144 = vdwg.mxu0
    %v145 = vmax.f32 %v137, 0.0
    %v146 = vmax.f32 %v142, 0.0
    %v147 = vld [vmem:[%s3] sm:$0xff]
    %v148 = vld [vmem:[%s3 + $0x8] sm:$0xff]
    %v149 = vld [vmem:[%s3 + $0x10] sm:$0xff]
    %v150 = vld [vmem:[%s3 + $0x18] sm:$0xff]
    %v151 = vld [vmem:[%s3 + $0x20] sm:$0xff]
    %v152 = vld [vmem:[%s3 + $0x28] sm:$0xff]
    %v153 = vld [vmem:[%s3 + $0x30] sm:$0xff]
    %v154 = vld [vmem:[%s3 + $0x38] sm:$0xff]
    %v155 = vld [vmem:[%s3 + $0x40] sm:$0xff]
    %v156 = vld [vmem:[%s3 + $0x48] sm:$0xff]
    %v157 = vld [vmem:[%s3 + $0x50] sm:$0xff]
    %v158 = vld [vmem:[%s3 + $0x58] sm:$0xff]
    %v159 = vld [vmem:[%s3 + $0x60] sm:$0xff]
    %v160 = vld [vmem:[%s3 + $0x68] sm:$0xff]
    %v161 = vld [vmem:[%s3 + $0x70] sm:$0xff]
    %v162 = vld [vmem:[%s3 + $0x78] sm:$0xff]
    %v163 = vld [vmem:[%s4] sm:$0x1]
    %v165 = vlaneseq
    %v166 = vshrl.u32 %v165, 7
    %v167 = vsub.s32 0, %v166
    %v168 = vrot.slane %v163, %v167
    %170 = vmatprep.subr.mxu0 0.0
    %171 = vmatpush1.msra.mxu0 %v147
    %172 = vmatprep.subr.mxu0 0.0
    %173 = vmatpush1.msra.mxu0 %v148
    %174 = vmatprep.subr.mxu0 0.0
    %175 = vmatpush1.msra.mxu0 %v149
    %176 = vmatprep.subr.mxu0 0.0
    %177 = vmatpush1.msra.mxu0 %v150
    %178 = vmatprep.subr.mxu0 0.0
    %179 = vmatpush1.msra.mxu0 %v151
    %180 = vmatprep.subr.mxu0 0.0
    %181 = vmatpush1.msra.mxu0 %v152
    %182 = vmatprep.subr.mxu0 0.0
    %183 = vmatpush1.msra.mxu0 %v153
    %184 = vmatprep.subr.mxu0 0.0
    %185 = vmatpush1.msra.mxu0 %v154
    %186 = vmatprep.subr.mxu0 0.0
    %187 = vmatpush1.msra.mxu0 %v155
    %188 = vmatprep.subr.mxu0 0.0
    %189 = vmatpush1.msra.mxu0 %v156
    %190 = vmatprep.subr.mxu0 0.0
    %191 = vmatpush1.msra.mxu0 %v157
    %192 = vmatprep.subr.mxu0 0.0
    %193 = vmatpush1.msra.mxu0 %v158
    %194 = vmatprep.subr.mxu0 0.0
    %195 = vmatpush1.msra.mxu0 %v159
    %196 = vmatprep.subr.mxu0 0.0
    %197 = vmatpush1.msra.mxu0 %v160
    %198 = vmatprep.subr.mxu0 0.0
    %199 = vmatpush1.msra.mxu0 %v161
    %200 = vmatprep.subr.mxu0 0.0
    %201 = vmatpush1.msra.mxu0 %v162
    %202 = vmatprep.subr.mxu0 0.0
    %203 = vmatpush1.msra.mxu0 0.0
    %204 = vmatprep.subr.mxu0 0.0
    %205 = vmatpush1.msra.mxu0 0.0
    %206 = vmatprep.subr.mxu0 0.0
    %207 = vmatpush1.msra.mxu0 0.0
    %208 = vmatprep.subr.mxu0 0.0
    %209 = vmatpush1.msra.mxu0 0.0
    %210 = vmatprep.subr.mxu0 0.0
    %211 = vmatpush1.msra.mxu0 0.0
    %212 = vmatprep.subr.mxu0 0.0
    %213 = vmatpush1.msra.mxu0 0.0
    %214 = vmatprep.subr.mxu0 0.0
    %215 = vmatpush1.msra.mxu0 0.0
    %216 = vmatprep.subr.mxu0 0.0
    %217 = vmatpush1.msra.mxu0 0.0
    %218 = vmatprep.subr.mxu0 0.0
    %219 = vmatpush1.msra.mxu0 0.0
    %220 = vmatprep.subr.mxu0 0.0
    %221 = vmatpush1.msra.mxu0 0.0
    %222 = vmatprep.subr.mxu0 0.0
    %223 = vmatpush1.msra.mxu0 0.0
    %224 = vmatprep.subr.mxu0 0.0
    %225 = vmatpush1.msra.mxu0 0.0
    %226 = vmatprep.subr.mxu0 0.0
    %227 = vmatpush1.msra.mxu0 0.0
    %228 = vmatprep.subr.mxu0 0.0
    %229 = vmatpush1.msra.mxu0 0.0
    %230 = vmatprep.subr.mxu0 0.0
    %231 = vmatpush1.msra.mxu0 0.0
    %232 = vmatprep.subr.mxu0 0.0
    %233 = vmatpush1.msra.mxu0 0.0
    %234 = vmatprep.mubr.f32.mxu0 0.0
    %235 = vmatmul.mubr.f32.gmra.mrb[0].mxu0 %v145
    %v236 = vpop.f32.mrb[0].mxu0
    %v237 = vadd.f32 %v168, %v236
    %v238 = vpop.f32.mrb[0].mxu0
    %239 = vmatprep.mubr.f32.mxu0 0.0
    %240 = vmatmul.mubr.f32.gmra.mrb[0].mxu0 %v146
    %v241 = vpop.f32.mrb[0].mxu0
    %v242 = vadd.f32 %v168, %v241
    %v243 = vpop.f32.mrb[0].mxu0
    %244 = vdwg.mxu0
    %v245 = vmax.f32 %v237, 0.0
    %v246 = vmax.f32 %v242, 0.0
    %v247 = vld [vmem:[%s5] sm:$0xff]
    %v248 = vld [vmem:[%s5 + $0x8] sm:$0xff]
    %v249 = vld [vmem:[%s5 + $0x10] sm:$0xff]
    %v250 = vld [vmem:[%s5 + $0x18] sm:$0xff]
    %v251 = vld [vmem:[%s5 + $0x20] sm:$0xff]
    %v252 = vld [vmem:[%s5 + $0x28] sm:$0xff]
    %v253 = vld [vmem:[%s5 + $0x30] sm:$0xff]
    %v254 = vld [vmem:[%s5 + $0x38] sm:$0xff]
    %v255 = vld [vmem:[%s5 + $0x40] sm:$0xff]
    %v256 = vld [vmem:[%s5 + $0x48] sm:$0xff]
    %v257 = vld [vmem:[%s5 + $0x50] sm:$0xff]
    %v258 = vld [vmem:[%s5 + $0x58] sm:$0xff]
    %v259 = vld [vmem:[%s5 + $0x60] sm:$0xff]
    %v260 = vld [vmem:[%s5 + $0x68] sm:$0xff]
    %v261 = vld [vmem:[%s5 + $0x70] sm:$0xff]
    %v262 = vld [vmem:[%s5 + $0x78] sm:$0xff]
    %v263 = vld [vmem:[%s6] sm:$0x1]
    %v265 = vlaneseq
    %v266 = vshrl.u32 %v265, 7
    %v267 = vsub.s32 0, %v266
    %v268 = vrot.slane %v263, %v267
    %270 = vmatprep.subr.mxu0 0.0
    %271 = vmatpush1.msra.mxu0 %v247
    %272 = vmatprep.subr.mxu0 0.0
    %273 = vmatpush1.msra.mxu0 %v248
    %274 = vmatprep.subr.mxu0 0.0
    %275 = vmatpush1.msra.mxu0 %v249
    %276 = vmatprep.subr.mxu0 0.0
    %277 = vmatpush1.msra.mxu0 %v250
    %278 = vmatprep.subr.mxu0 0.0
    %279 = vmatpush1.msra.mxu0 %v251
    %280 = vmatprep.subr.mxu0 0.0
    %281 = vmatpush1.msra.mxu0 %v252
    %282 = vmatprep.subr.mxu0 0.0
    %283 = vmatpush1.msra.mxu0 %v253
    %284 = vmatprep.subr.mxu0 0.0
    %285 = vmatpush1.msra.mxu0 %v254
    %286 = vmatprep.subr.mxu0 0.0
    %287 = vmatpush1.msra.mxu0 %v255
    %288 = vmatprep.subr.mxu0 0.0
    %289 = vmatpush1.msra.mxu0 %v256
    %290 = vmatprep.subr.mxu0 0.0
    %291 = vmatpush1.msra.mxu0 %v257
    %292 = vmatprep.subr.mxu0 0.0
    %293 = vmatpush1.msra.mxu0 %v258
    %294 = vmatprep.subr.mxu0 0.0
    %295 = vmatpush1.msra.mxu0 %v259
    %296 = vmatprep.subr.mxu0 0.0
    %297 = vmatpush1.msra.mxu0 %v260
    %298 = vmatprep.subr.mxu0 0.0
    %299 = vmatpush1.msra.mxu0 %v261
    %300 = vmatprep.subr.mxu0 0.0
    %301 = vmatpush1.msra.mxu0 %v262
    %302 = vmatprep.subr.mxu0 0.0
    %303 = vmatpush1.msra.mxu0 0.0
    %304 = vmatprep.subr.mxu0 0.0
    %305 = vmatpush1.msra.mxu0 0.0
    %306 = vmatprep.subr.mxu0 0.0
    %307 = vmatpush1.msra.mxu0 0.0
    %308 = vmatprep.subr.mxu0 0.0
    %309 = vmatpush1.msra.mxu0 0.0
    %310 = vmatprep.subr.mxu0 0.0
    %311 = vmatpush1.msra.mxu0 0.0
    %312 = vmatprep.subr.mxu0 0.0
    %313 = vmatpush1.msra.mxu0 0.0
    %314 = vmatprep.subr.mxu0 0.0
    %315 = vmatpush1.msra.mxu0 0.0
    %316 = vmatprep.subr.mxu0 0.0
    %317 = vmatpush1.msra.mxu0 0.0
    %318 = vmatprep.subr.mxu0 0.0
    %319 = vmatpush1.msra.mxu0 0.0
    %320 = vmatprep.subr.mxu0 0.0
    %321 = vmatpush1.msra.mxu0 0.0
    %322 = vmatprep.subr.mxu0 0.0
    %323 = vmatpush1.msra.mxu0 0.0
    %324 = vmatprep.subr.mxu0 0.0
    %325 = vmatpush1.msra.mxu0 0.0
    %326 = vmatprep.subr.mxu0 0.0
    %327 = vmatpush1.msra.mxu0 0.0
    %328 = vmatprep.subr.mxu0 0.0
    %329 = vmatpush1.msra.mxu0 0.0
    %330 = vmatprep.subr.mxu0 0.0
    %331 = vmatpush1.msra.mxu0 0.0
    %332 = vmatprep.subr.mxu0 0.0
    %333 = vmatpush1.msra.mxu0 0.0
    %334 = vmatprep.mubr.f32.mxu0 0.0
    %335 = vmatmul.mubr.f32.gmra.mrb[0].mxu0 %v245
    %v336 = vpop.f32.mrb[0].mxu0
    %v337 = vadd.f32 %v268, %v336
    %v338 = vpop.f32.mrb[0].mxu0
    %339 = vmatprep.mubr.f32.mxu0 0.0
    %340 = vmatmul.mubr.f32.gmra.mrb[0].mxu0 %v246
    %v341 = vpop.f32.mrb[0].mxu0
    %v342 = vadd.f32 %v268, %v341
    %v343 = vpop.f32.mrb[0].mxu0
    %344 = vdwg.mxu0
    %v345 = vmul.f32 %v337, 0.1
    %v346 = vmul.f32 %v342, 0.1
    %v347 = vmul.f32 %v337, 0.2
    %v348 = vmul.f32 %v342, 0.2
    %v349 = vmin.f32 %v347, 4.1351666
    %v350 = vmin.f32 %v348, 4.1351666
    %353 = vrot.lane.b32.xlu0 %v28, 2
    %v354 = vpop.permute.xlu0 %353
    %355 = vrot.lane.b32.xlu0 %v30, 2
    %v356 = vpop.permute.xlu0 %355
    %v359 = vsub.f32 %v28, %v354
    %v360 = vsub.f32 %v30, %v356
    %v361 = vmul.f32 %v359, 0.5
    %v362 = vmul.f32 %v360, 0.5
    %365 = vrot.lane.b32.xlu0 %v361, 126
    %v366 = vpop.permute.xlu0 %365
    %367 = vrot.lane.b32.xlu0 %v362, 126
    %v368 = vpop.permute.xlu0 %367
    %v371 = vadd.f32 %v28, %v366
    %v372 = vadd.f32 %v30, %v368
    %374 = vset.pattern.permute.xlu0 74
    %375 = vperm.xlu0 %374, %v359
    %v376 = vpop.permute.xlu0 %375
    %379 = vset.pattern.permute.xlu0 74
    %380 = vperm.xlu0 %379, %v360
    %v381 = vpop.permute.xlu0 %380
    %v383 = vmul.f32 %v345, %v376
    %v384 = vmul.f32 %v346, %v381
    %386 = vset.pattern.permute.xlu0 72
    %387 = vperm.xlu0 %386, %v371
    %v388 = vpop.permute.xlu0 %387
    %391 = vset.pattern.permute.xlu0 72
    %392 = vperm.xlu0 %391, %v372
    %v393 = vpop.permute.xlu0 %392
    %v395 = vadd.f32 %v383, %v388
    %v396 = vadd.f32 %v384, %v393
    %397 = vset.pattern.permute.xlu0 75
    %398 = vperm.xlu0 %397, %v359
    %v399 = vpop.permute.xlu0 %398
    %401 = vset.pattern.permute.xlu0 75
    %402 = vperm.xlu0 %401, %v360
    %v403 = vpop.permute.xlu0 %402
    %v405 = vmul.f32 %v345, %v399
    %v406 = vmul.f32 %v346, %v403
    %407 = vset.pattern.permute.xlu0 73
    %408 = vperm.xlu0 %407, %v371
    %v409 = vpop.permute.xlu0 %408
    %411 = vset.pattern.permute.xlu0 73
    %412 = vperm.xlu0 %411, %v372
    %v413 = vpop.permute.xlu0 %412
    %v415 = vadd.f32 %v405, %v409
    %v416 = vadd.f32 %v406, %v413
    %v417 = vmul.f32 %v349, 1.442695
    %v418 = vpow.pop %v417
    %v419 = vmul.f32 %v350, 1.442695
    %v420 = vpow.pop %v419
    %v421 = vmul.f32 %v418, %v376
    %v422 = vmul.f32 %v420, %v381
    %v423 = vmul.f32 %v418, %v399
    %v424 = vmul.f32 %v420, %v403
    %v425 = vmul.f32 %v421, 0.5
    %v426 = vmul.f32 %v422, 0.5
    %429 = vrot.lane.b32.xlu0 %v425, 118
    %v430 = vpop.permute.xlu0 %429
    %431 = vrot.lane.b32.xlu0 %v426, 118
    %v432 = vpop.permute.xlu0 %431
    %v435 = vsub.f32 %v395, %v430
    %v436 = vsub.f32 %v396, %v432
    %v437 = vmax.f32 %v435, 0.0
    %v438 = vmax.f32 %v436, 0.0
    %439 = vset.pattern.permute.xlu0 76
    %440 = vperm.xlu0 %439, %v28
    %v441 = vpop.permute.xlu0 %440
    %443 = vset.pattern.permute.xlu0 76
    %444 = vperm.xlu0 %443, %v30
    %v445 = vpop.permute.xlu0 %444
    %v447 = vmin.f32 %v437, %v441
    %v448 = vmin.f32 %v438, %v445
    %v449 = vmul.f32 %v423, 0.5
    %v450 = vmul.f32 %v424, 0.5
    %453 = vrot.lane.b32.xlu0 %v449, 118
    %v454 = vpop.permute.xlu0 %453
    %455 = vrot.lane.b32.xlu0 %v450, 118
    %v456 = vpop.permute.xlu0 %455
    %v459 = vsub.f32 %v415, %v454
    %v460 = vsub.f32 %v416, %v456
    %v461 = vmax.f32 %v459, 0.0
    %v462 = vmax.f32 %v460, 0.0
    %463 = vset.pattern.permute.xlu0 77
    %464 = vperm.xlu0 %463, %v28
    %v465 = vpop.permute.xlu0 %464
    %467 = vset.pattern.permute.xlu0 77
    %468 = vperm.xlu0 %467, %v30
    %v469 = vpop.permute.xlu0 %468
    %v471 = vmin.f32 %v461, %v465
    %v472 = vmin.f32 %v462, %v469
    %v473 = vadd.f32 %v395, %v430
    %v474 = vadd.f32 %v396, %v432
    %v475 = vmax.f32 %v473, 0.0
    %v476 = vmax.f32 %v474, 0.0
    %v477 = vmin.f32 %v475, %v441
    %v478 = vmin.f32 %v476, %v445
    %v479 = vadd.f32 %v415, %v454
    %v480 = vadd.f32 %v416, %v456
    %v481 = vmax.f32 %v479, 0.0
    %v482 = vmax.f32 %v480, 0.0
    %v483 = vmin.f32 %v481, %v465
    %v484 = vmin.f32 %v482, %v469
    %vm485 = vcmask 39936
    %v486 = vsel %vm485, %v337, -inf
    %487 = vmax.xlane.f32.xlu0 %v486
    %v488 = vpop.xlane.xlu0 %487
    %v489 = vsel %vm485, %v342, -inf
    %490 = vmax.xlane.f32.xlu0 %v489
    %v491 = vpop.xlane.xlu0 %490
    %v492 = vsub.f32 %v337, %v488
    %v493 = vsub.f32 %v342, %v491
    %v494 = vmul.f32 %v492, 1.442695
    %v495 = vpow.pop %v494
    %v496 = vmul.f32 %v493, 1.442695
    %v497 = vpow.pop %v496
    %v498 = vsel %vm485, %v495, 0.0
    %499 = vadd.xlane.f32.xlu0 %v498
    %v500 = vpop.xlane.xlu0 %499
    %v501 = vsel %vm485, %v497, 0.0
    %502 = vadd.xlane.f32.xlu0 %v501
    %v503 = vpop.xlane.xlu0 %502
    %v504 = vrcp.pop %v500
    %v505 = vrcp.pop %v503
    %v506 = vmul.f32 %v495, %v504
    %v507 = vmul.f32 %v497, %v505
    %510 = vrot.lane.b32.xlu0 %v477, 10
    %v511 = vpop.permute.xlu0 %510
    %512 = vrot.lane.b32.xlu0 %v478, 10
    %v513 = vpop.permute.xlu0 %512
    %518 = vrot.lane.b32.xlu0 %v483, 10
    %v519 = vpop.permute.xlu0 %518
    %520 = vrot.lane.b32.xlu0 %v484, 10
    %v521 = vpop.permute.xlu0 %520
    %v524 = vsel %vm485, %v506, %v447
    %v525 = vsel %vm485, %v507, %v448
    %vm526 = vcmask 80896
    %v527 = vsel %vm526, %v524, %v471
    %v528 = vsel %vm526, %v525, %v472
    %vm529 = vcmask 121856
    %v530 = vsel %vm529, %v527, %v511
    %v531 = vsel %vm529, %v528, %v513
    %vm532 = vcmask 162816
    %v533 = vsel %vm532, %v530, %v519
    %v534 = vsel %vm532, %v531, %v521
    %vm535 = vcmask 203776
    %v536 = vsel %vm535, %v533, 0.0
    %v537 = vsel %vm535, %v534, 0.0
    %538 = vst [vmem:[#allocation2] sm:$0xff] %v536
    %539 = vst [vmem:[#allocation2 + $0x8] sm:$0xff] %v537
    // Predicated region
    $region30: #{_device_forward.1} parent=1 // pred_check
      _
    $region31: #{_device_forward.1} parent=1 // pred_check_branch
      %541 = sbr.rel (0) target = $region33
    $region32: #{_device_forward.1} parent=1 // pred_region
      %s543 = ssub.s32 256, 256
      %544 = vsyncadd [#allocation3], %s543
      %s545 = sshll.u32 [#allocation2], 4
      %s546 = int_to_ptr.vmem [resolvable:$true] %s545
      %551 = dma.vmem_to_hbm [thread:$0]  %s546, 256, %s7, [#allocation3], 128, 128, 8
    $region33: #{_device_forward.1} parent=1 // pred_fallthru
      _
    // Predicated region
    $region34: #{_device_forward.1} parent=1 // pred_check
      _
    $region35: #{_device_forward.1} parent=1 // pred_check_branch
      %553 = sbr.rel (0) target = $region37
    $region36: #{_device_forward.1} parent=1 // pred_region
      %554 = dma.done [#allocation3], 256
    $region37: #{_device_forward.1} parent=1 // pred_fallthru
      _
    %555 = vsyncpa [#allocation3], 1

</llo_original>
